<compile_context>
chip_gen: v7x
topology: tpu7x:2x2x1
jax: 0.10.0
libtpu: 0.0.40
codegen_flags: <defaults>
</compile_context>

<pallas_src>
import jax
import jax.numpy as jnp
import numpy as np
from jax.experimental import pallas as pl
from jax.experimental.pallas import tpu as pltpu


def _round_up(x: int, m: int) -> int:
    return ((x + m - 1) // m) * m


def build_sma_coeff_matrix(output_length: int, window: int,
                           padded_window: int | None = None) -> np.ndarray:
    """Static (output_length, WP) matrix A such that preds = A @ win_init.

    win_init holds the last `window` history rows; the autoregressive SMA
    recurrence (mean of last `window` rows, append forecast, repeat) is linear
    in win_init, so each forecast step is a fixed linear combination of the
    initial window.  Columns beyond `window` (sublane padding) are zero.
    """
    coeffs = np.eye(window, dtype=np.float64)                 # current window rows
    A = np.zeros((output_length, window), dtype=np.float64)   # over win_init basis
    for t in range(output_length):
        new_row = coeffs.mean(axis=0)                         # SMA of current window
        A[t] = new_row
        coeffs = np.vstack([coeffs[1:], new_row[None, :]])    # drop oldest, append
    if padded_window is not None and padded_window > window:
        A = np.pad(A, ((0, 0), (0, padded_window - window)))
    return A.astype(np.float32)


def _sma_matmul_kernel(a_ref, win_ref, o_ref):
    # a_ref:   (O, WP)  static SMA coefficient matrix, resident across grid steps
    # win_ref: (WP, TN) lane tile of the last-W history rows (batch*dim folded to lanes)
    # o_ref:   (O, TN)  forecasts, lane-dense full-width store
    o_ref[...] = jnp.dot(
        a_ref[...],
        win_ref[...].astype(jnp.float32),        # VMEM-side upcast; HBM stream stays x.dtype
        preferred_element_type=jnp.float32,
    )


def statistical_sma_forward(x, output_length: int, window_size: int = 5, *,
                            use_pallas: bool | None = None, tn_max: int = 2048):
    """JAX/Pallas equivalent of StatisticalSMA.forward (input_dim == output_dim)."""
    B, input_length, D = x.shape
    W = min(window_size, input_length)
    BD = B * D

    if not jnp.issubdtype(x.dtype, jnp.floating):
        x = x.astype(jnp.float32)

    if use_pallas is None:
        # Tiny problems: the pallas_call launch/DMA overhead dominates; let XLA fuse.
        use_pallas = BD >= 256

    # The recurrence only ever reads the last W history rows.
    win = x[:, input_length - W:, :]                                  # (B, W, D)

    if not use_pallas:
        A = jnp.asarray(build_sma_coeff_matrix(output_length, W))    # (O, W)
        preds = jnp.einsum("ow,bwd->bod", A, win.astype(jnp.float32))
        return preds.astype(jnp.float32)

    # Static padding: W -> multiple of 8 sublanes, lanes -> multiple of the tile.
    WP = _round_up(max(W, 8), 8)
    TN = min(_round_up(tn_max, 128), _round_up(BD, 128))              # lane tile (>=128)
    N_pad = _round_up(BD, TN)

    A = jnp.asarray(build_sma_coeff_matrix(output_length, W, WP))     # (O, WP), f32

    # Fold batch into lanes: (B, W, D) -> (W, B*D); zero-pad sublanes + lanes.
    win = jnp.transpose(win, (1, 0, 2)).reshape(W, BD)
    win = jnp.pad(win, ((0, WP - W), (0, N_pad - BD)))                # (WP, N_pad)

    out = pl.pallas_call(
        _sma_matmul_kernel,
        out_shape=jax.ShapeDtypeStruct((output_length, N_pad), jnp.float32),
        grid=(N_pad // TN,),
        in_specs=[
            pl.BlockSpec((output_length, WP), lambda j: (0, 0)),      # A resident
            pl.BlockSpec((WP, TN), lambda j: (0, j)),                 # lane-tiled window
        ],
        out_specs=pl.BlockSpec((output_length, TN), lambda j: (0, j)),
        compiler_params=pltpu.CompilerParams(
            dimension_semantics=("parallel",),                        # megacore on v7x
        ),
    )(A, win)

    # Strip lane padding and restore (B, O, D).
    out = out[:, :BD].reshape(output_length, B, D)
    return jnp.transpose(out, (1, 0, 2))


def _reference_sma(x_np, output_length, window_size=5):
    """NumPy port of the PyTorch forward (input_dim == output_dim path)."""
    x_np = np.asarray(x_np, dtype=np.float32)
    B, Lin, D = x_np.shape
    W = min(window_size, Lin)
    out = np.zeros((B, output_length, D), dtype=np.float32)
    for b in range(B):
        history = x_np[b].copy()
        step_forecast = None
        for step in range(output_length):
            if step > 0:
                history = np.vstack([history, step_forecast.reshape(1, -1)])
            sma = np.mean(history[-W:, :], axis=0)
            step_forecast = sma
            out[b, step, :] = sma.astype(np.float32)
    return out


if __name__ == "__main__":
    fwd = jax.jit(
        statistical_sma_forward,
        static_argnames=("output_length", "window_size", "use_pallas", "tn_max"),
    )

    # Config 1: module defaults (input_dim == output_dim == 8, input_length=16,
    # output_length=8, window_size=5), Pallas path forced.
    key = jax.random.PRNGKey(0)
    x1 = jax.random.normal(key, (2, 16, 8), dtype=jnp.float32)
    p1 = jax.block_until_ready(fwd(x1, output_length=8, window_size=5, use_pallas=True))
    np.testing.assert_allclose(
        np.asarray(p1), _reference_sma(np.asarray(x1), 8, 5), rtol=1e-5, atol=1e-5)

    # Auto-dispatch (small shapes fall back to fused XLA einsum) must agree.
    p1_auto = jax.block_until_ready(fwd(x1, output_length=8, window_size=5))
    np.testing.assert_allclose(np.asarray(p1_auto), np.asarray(p1), rtol=1e-5, atol=1e-5)

    # Config 2: multi-tile lane grid (B*D=320, tn_max=128 -> 3 grid steps).
    x2 = jax.random.normal(jax.random.PRNGKey(0), (4, 32, 80), dtype=jnp.float32)
    p2 = jax.block_until_ready(
        fwd(x2, output_length=8, window_size=5, use_pallas=True, tn_max=128))
    np.testing.assert_allclose(
        np.asarray(p2), _reference_sma(np.asarray(x2), 8, 5), rtol=1e-5, atol=1e-5)

    # Config 3: bf16 input stream (no f32 upcast in HBM; cast happens in VMEM).
    x3 = jax.random.normal(jax.random.PRNGKey(0), (4, 16, 80), dtype=jnp.bfloat16)
    p3 = jax.block_until_ready(fwd(x3, output_length=8, window_size=5, use_pallas=True))
    ref3 = _reference_sma(np.asarray(x3).astype(np.float32), 8, 5)
    np.testing.assert_allclose(np.asarray(p3), ref3, rtol=1e-5, atol=1e-5)

    print("KERNEL_OK")
</pallas_src>

<mosaic_0001>
module attributes {stable_mosaic.version = 11 : i64} {
  func.func @_sma_matmul_kernel(%arg0: i32, %arg1: memref<8x8xf32, #tpu.memory_space<vmem>>, %arg2: memref<8x128xf32, #tpu.memory_space<vmem>>, %arg3: memref<8x128xf32, #tpu.memory_space<vmem>>) attributes {dimension_semantics = [#tpu.dimension_semantics<parallel>], iteration_bounds = array<i64: 1>, scalar_prefetch = 0 : i64, scratch_operands = 0 : i64, tpu.core_type = #tpu.core_type<tc>, window_params = [{pipeline_mode = #tpu.pipeline_mode<synchronous>, transform_indices = @transform_0, window_bounds = array<i64: 8, 8>}, {transform_indices = @transform_1, window_bounds = array<i64: 8, 128>}, {transform_indices = @transform_2, window_bounds = array<i64: 8, 128>}]} {
    %c0 = arith.constant 0 : index
    %c0_0 = arith.constant 0 : index
    %0 = vector.load %arg1[%c0, %c0_0] : memref<8x8xf32, #tpu.memory_space<vmem>>, vector<8x8xf32>
    %c0_1 = arith.constant 0 : index
    %c0_2 = arith.constant 0 : index
    %1 = vector.load %arg2[%c0_1, %c0_2] : memref<8x128xf32, #tpu.memory_space<vmem>>, vector<8x128xf32>
    %cst = arith.constant dense<0.000000e+00> : vector<8x128xf32>
    %2 = tpu.matmul %0, %1, %cst {dimension_numbers = #tpu.dot_dimension_numbers<[1], [0], [0], [1], [0, 0, 1, 1], [], []>} : vector<8x8xf32>, vector<8x128xf32>, vector<8x128xf32> -> vector<8x128xf32>
    %c0_3 = arith.constant 0 : index
    %c0_4 = arith.constant 0 : index
    %3 = vector.load %arg3[%c0_3, %c0_4] : memref<8x128xf32, #tpu.memory_space<vmem>>, vector<8x128xf32>
    tpu.vector_store %arg3[%c0_3, %c0_4], %2 {strides = array<i32>} : memref<8x128xf32, #tpu.memory_space<vmem>>, vector<8x128xf32>,
    return
  }
  func.func @transform_0(%arg0: i32) -> (i32, i32) {
    %c0_i32 = arith.constant 0 : i32
    %c0_i32_0 = arith.constant 0 : i32
    %c0_i32_1 = arith.constant 0 : i32
    return %c0_i32, %c0_i32_0 : i32, i32
  }
  func.func @transform_1(%arg0: i32) -> (i32, i32) {
    %c0_i32 = arith.constant 0 : i32
    %c0_i32_0 = arith.constant 0 : i32
    return %c0_i32, %arg0 : i32, i32
  }
  func.func @transform_2(%arg0: i32) -> (i32, i32) {
    %c0_i32 = arith.constant 0 : i32
    %c0_i32_0 = arith.constant 0 : i32
    return %c0_i32, %arg0 : i32, i32
  }
}

</mosaic_0001>

<llo_original>
// kernel: statistical_sma_forward.1
$region0: #{statistical_sma_forward.1}
  #allocation0 [shape = 'u32[]', space=smem, size = 0x4, offset = 0x4, fixed_abs, tag = 'smem constant byte address 0x4 - core index']
  #allocation1 [shape = 'u32[144,128]{1,0:T(1,128)}', space=vmem, size = 0x12000, scoped, tag = 'internal scratch']
  %s0 = inlined_call_operand.vmem [shape: f32[8,8], index: 0, kind: input, shape index: {}]
  %s1 = inlined_call_operand.vmem [shape: f32[8,128], index: 1, kind: input, shape index: {}]
  %s2 = inlined_call_operand.vmem [shape: f32[8,128], index: 2, kind: output, shape index: {}]
  %s3 = sld [smem:[#allocation0]]
  $region18: #{statistical_sma_forward.1} parent=0
    _
  %s5 = ssub.s32 1, %s3
  %s6 = scalar_select 0, %s5, %s3
  // Predicated region
  $region2: #{statistical_sma_forward.1} parent=0 // pred_check
    _
  $region3: #{statistical_sma_forward.1} parent=0 // pred_check_branch
    %8 = sbr.rel (0) target = $region5
  $region4: #{statistical_sma_forward.1} parent=0 // pred_region
    _
  $region5: #{statistical_sma_forward.1} parent=0 // pred_fallthru
    _
  // Predicated region
  $region6: #{statistical_sma_forward.1} parent=0 // pred_check
    _
  $region7: #{statistical_sma_forward.1} parent=0 // pred_check_branch
    %10 = sbr.rel (0) target = $region9
  $region8: #{statistical_sma_forward.1} parent=0 // pred_region
    _
  $region9: #{statistical_sma_forward.1} parent=0 // pred_fallthru
    _
  %v11 = vld [vmem:[%s0] sm:$0xff]
  %v12 = vld [vmem:[%s1] sm:$0xff]
  %vm13 = vcmask 64512
  %v15 = vsel %vm13, %v11, 0
  %17 = vmatprep.subr.mxu0 0.0
  %18 = vmatpush1.msra.mxu0 %v12
  %19 = vmatprep.subr.mxu0 0.0
  %20 = vmatpush1.msra.mxu0 0.0
  %21 = vmatprep.subr.mxu0 0.0
  %22 = vmatpush1.msra.mxu0 0.0
  %23 = vmatprep.subr.mxu0 0.0
  %24 = vmatpush1.msra.mxu0 0.0
  %25 = vmatprep.subr.mxu0 0.0
  %26 = vmatpush1.msra.mxu0 0.0
  %27 = vmatprep.subr.mxu0 0.0
  %28 = vmatpush1.msra.mxu0 0.0
  %29 = vmatprep.subr.mxu0 0.0
  %30 = vmatpush1.msra.mxu0 0.0
  %31 = vmatprep.subr.mxu0 0.0
  %32 = vmatpush1.msra.mxu0 0.0
  %33 = vmatprep.subr.mxu0 0.0
  %34 = vmatpush1.msra.mxu0 0.0
  %35 = vmatprep.subr.mxu0 0.0
  %36 = vmatpush1.msra.mxu0 0.0
  %37 = vmatprep.subr.mxu0 0.0
  %38 = vmatpush1.msra.mxu0 0.0
  %39 = vmatprep.subr.mxu0 0.0
  %40 = vmatpush1.msra.mxu0 0.0
  %41 = vmatprep.subr.mxu0 0.0
  %42 = vmatpush1.msra.mxu0 0.0
  %43 = vmatprep.subr.mxu0 0.0
  %44 = vmatpush1.msra.mxu0 0.0
  %45 = vmatprep.subr.mxu0 0.0
  %46 = vmatpush1.msra.mxu0 0.0
  %47 = vmatprep.subr.mxu0 0.0
  %48 = vmatpush1.msra.mxu0 0.0
  %49 = vmatprep.subr.mxu0 0.0
  %50 = vmatpush1.msra.mxu0 0.0
  %51 = vmatprep.subr.mxu0 0.0
  %52 = vmatpush1.msra.mxu0 0.0
  %53 = vmatprep.subr.mxu0 0.0
  %54 = vmatpush1.msra.mxu0 0.0
  %55 = vmatprep.subr.mxu0 0.0
  %56 = vmatpush1.msra.mxu0 0.0
  %57 = vmatprep.subr.mxu0 0.0
  %58 = vmatpush1.msra.mxu0 0.0
  %59 = vmatprep.subr.mxu0 0.0
  %60 = vmatpush1.msra.mxu0 0.0
  %61 = vmatprep.subr.mxu0 0.0
  %62 = vmatpush1.msra.mxu0 0.0
  %63 = vmatprep.subr.mxu0 0.0
  %64 = vmatpush1.msra.mxu0 0.0
  %65 = vmatprep.subr.mxu0 0.0
  %66 = vmatpush1.msra.mxu0 0.0
  %67 = vmatprep.subr.mxu0 0.0
  %68 = vmatpush1.msra.mxu0 0.0
  %69 = vmatprep.subr.mxu0 0.0
  %70 = vmatpush1.msra.mxu0 0.0
  %71 = vmatprep.subr.mxu0 0.0
  %72 = vmatpush1.msra.mxu0 0.0
  %73 = vmatprep.subr.mxu0 0.0
  %74 = vmatpush1.msra.mxu0 0.0
  %75 = vmatprep.subr.mxu0 0.0
  %76 = vmatpush1.msra.mxu0 0.0
  %77 = vmatprep.subr.mxu0 0.0
  %78 = vmatpush1.msra.mxu0 0.0
  %79 = vmatprep.subr.mxu0 0.0
  %80 = vmatpush1.msra.mxu0 0.0
  %81 = vmatprep.mubr.f32.mxu0 0.0
  %82 = vmatmul.mubr.f32.gmra.mrb[0].mxu0 %v15
  %v83 = vpop.f32.mrb[0].mxu0
  %v84 = vadd.f32 0.0, %v83
  %v85 = vpop.f32.mrb[0].mxu0
  %86 = vdwg.mxu0
  %87 = vst [vmem:[%s2] sm:$0xff] %v84
  // Predicated region
  $region10: #{statistical_sma_forward.1} parent=0 // pred_check
    _
  $region11: #{statistical_sma_forward.1} parent=0 // pred_check_branch
    %89 = sbr.rel (0) target = $region13
  $region12: #{statistical_sma_forward.1} parent=0 // pred_region
    _
  $region13: #{statistical_sma_forward.1} parent=0 // pred_fallthru
    _
  // Predicated region
  $region14: #{statistical_sma_forward.1} parent=0 // pred_check
    _
  $region15: #{statistical_sma_forward.1} parent=0 // pred_check_branch
    %91 = sbr.rel (0) target = $region17
  $region16: #{statistical_sma_forward.1} parent=0 // pred_region
    _
  $region17: #{statistical_sma_forward.1} parent=0 // pred_fallthru
    _

</llo_original>
